<compile_context>
chip_gen: v5e
topology: v5e:2x2
jax: 0.10.0
libtpu: 0.0.40
codegen_flags: <defaults>
</compile_context>

<pallas_src>
import jax
import jax.numpy as jnp
from jax.experimental import pallas as pl
from jax.experimental.pallas import tpu as pltpu

IN_FEATURES = 13
HIDDEN = 64
OUT_FEATURES = 1


def _mlp_kernel(xT_ref, w1_ref, w2_ref, w3_ref, tail_ref, o_ref):
    """One batch tile of the 4-layer MLP in transposed (batch-on-lanes) layout.

    xT_ref : (13, TB)  bf16   transposed input tile
    w1_ref : (64, 13)  bf16   layer-1 weight, PyTorch (out, in) layout
    w2_ref : (64, 64)  bf16
    w3_ref : (64, 64)  bf16
    tail   : (64, 5)   f32    columns = [b1, b2, b3, w4_col, b4 (row 0)]
    o_ref  : (1, TB)   f32    lane-dense output row
    """
    tail = tail_ref[...]
    b1 = tail[:, 0:1]            # (64, 1) broadcast over lanes (= batch)
    b2 = tail[:, 1:2]
    b3 = tail[:, 2:3]
    w4 = tail[:, 3:4]            # (64, 1) final-layer weight column
    b4 = tail[0:1, 4:5]          # (1, 1)  final-layer bias

    xT = xT_ref[...]             # (13, TB) bf16

    # Layers 1-3 on the MXU: bf16 operands, f32 accumulation; bias+ReLU in f32.
    h = jnp.dot(w1_ref[...], xT, preferred_element_type=jnp.float32)      # (64, TB)
    h = jnp.maximum(h + b1, 0.0)
    h = jnp.dot(w2_ref[...], h.astype(jnp.bfloat16),
                preferred_element_type=jnp.float32)
    h = jnp.maximum(h + b2, 0.0)
    h = jnp.dot(w3_ref[...], h.astype(jnp.bfloat16),
                preferred_element_type=jnp.float32)
    h = jnp.maximum(h + b3, 0.0)

    # Layer 4 (64 -> 1): VPU multiply + sublane reduction instead of an MXU
    # matmul with a single useful output row.  All f32.
    y = jnp.sum(h * w4, axis=0, keepdims=True) + b4                       # (1, TB)
    o_ref[...] = y.astype(o_ref.dtype)


def _pack_params(params):
    """PyTorch-convention params -> kernel operands.

    params = ((W1,b1),(W2,b2),(W3,b3),(W4,b4)) with W*: (out, in), b*: (out,).
    Returns bf16 (out, in) weight matrices for layers 1-3 and a packed f32
    (64, 5) 'tail' array: [b1 | b2 | b3 | W4 column | b4 at row 0].
    """
    (w1, b1), (w2, b2), (w3, b3), (w4, b4) = params
    tail = jnp.zeros((HIDDEN, 5), jnp.float32)
    tail = tail.at[:, 0].set(b1)
    tail = tail.at[:, 1].set(b2)
    tail = tail.at[:, 2].set(b3)
    tail = tail.at[:, 3].set(w4[0, :])
    tail = tail.at[0, 4].set(b4[0])
    return (w1.astype(jnp.bfloat16), w2.astype(jnp.bfloat16),
            w3.astype(jnp.bfloat16), tail)


def _round_up(v, m):
    return ((v + m - 1) // m) * m


def net_forward(x, params, *, tile_b=1024):
    """Pallas forward pass of Net. x: (B, 13) f32 -> (B, 1) f32."""
    B, F = x.shape
    assert F == IN_FEATURES
    w1, w2, w3, tail = _pack_params(params)

    # Tile selection: multiple of 128 (lane width), big enough to amortize
    # per-step overhead, capped so the grid keeps >= 2 steps when B allows it
    # (so both v7x TensorCores get work on the "parallel" axis).
    tile_b = max(128, (int(tile_b) // 128) * 128)
    tile_b = min(tile_b, max(128, _round_up((B + 1) // 2, 128)))

    num_tiles = pl.cdiv(B, tile_b)
    b_pad = num_tiles * tile_b

    # Wrapper-side layout plumbing: cast to bf16 (halves the x DMA bytes),
    # pad the ragged batch with zeros and transpose so batch sits on lanes.
    xT = jnp.pad(x.astype(jnp.bfloat16), ((0, b_pad - B), (0, 0))).T   # (13, b_pad)

    out = pl.pallas_call(
        _mlp_kernel,
        out_shape=jax.ShapeDtypeStruct((1, b_pad), jnp.float32),
        grid_spec=pltpu.PrefetchScalarGridSpec(
            num_scalar_prefetch=0,
            grid=(num_tiles,),
            in_specs=[
                pl.BlockSpec((IN_FEATURES, tile_b), lambda i: (0, i)),  # x^T tile
                pl.BlockSpec(w1.shape, lambda i: (0, 0)),               # replicated
                pl.BlockSpec(w2.shape, lambda i: (0, 0)),
                pl.BlockSpec(w3.shape, lambda i: (0, 0)),
                pl.BlockSpec(tail.shape, lambda i: (0, 0)),
            ],
            out_specs=pl.BlockSpec((1, tile_b), lambda i: (0, i)),      # lane-dense
        ),
        compiler_params=pltpu.CompilerParams(
            dimension_semantics=("parallel",)),
    )(xT, w1, w2, w3, tail)

    # (1, b_pad) lane-dense row -> (B, 1)
    return out[0, :B].reshape(B, OUT_FEATURES)


def init_params(key):
    """PyTorch nn.Linear default init: U(-1/sqrt(fan_in), 1/sqrt(fan_in)) for
    weight and bias.  Weights kept in PyTorch (out, in) layout."""
    dims = [(IN_FEATURES, HIDDEN), (HIDDEN, HIDDEN),
            (HIDDEN, HIDDEN), (HIDDEN, OUT_FEATURES)]
    params = []
    for fan_in, fan_out in dims:
        key, kw, kb = jax.random.split(key, 3)
        bound = 1.0 / (fan_in ** 0.5)
        W = jax.random.uniform(kw, (fan_out, fan_in), jnp.float32, -bound, bound)
        b = jax.random.uniform(kb, (fan_out,), jnp.float32, -bound, bound)
        params.append((W, b))
    return tuple(params)


def net_forward_ref(x, params):
    """Pure-f32 JAX reference mirroring the PyTorch module exactly."""
    (w1, b1), (w2, b2), (w3, b3), (w4, b4) = params
    h = jnp.maximum(x @ w1.T + b1, 0.0)
    h = jnp.maximum(h @ w2.T + b2, 0.0)
    h = jnp.maximum(h @ w3.T + b3, 0.0)
    return h @ w4.T + b4


def net_forward_ref_mixed(x, params):
    """Reference mirroring the kernel's bf16-operand / f32-accumulate math."""
    (w1, b1), (w2, b2), (w3, b3), (w4, b4) = params
    h = jnp.dot(x.astype(jnp.bfloat16), w1.T.astype(jnp.bfloat16),
                preferred_element_type=jnp.float32)
    h = jnp.maximum(h + b1, 0.0)
    h = jnp.dot(h.astype(jnp.bfloat16), w2.T.astype(jnp.bfloat16),
                preferred_element_type=jnp.float32)
    h = jnp.maximum(h + b2, 0.0)
    h = jnp.dot(h.astype(jnp.bfloat16), w3.T.astype(jnp.bfloat16),
                preferred_element_type=jnp.float32)
    h = jnp.maximum(h + b3, 0.0)
    return jnp.sum(h * w4[0][None, :], axis=-1, keepdims=True) + b4


if __name__ == "__main__":
    key = jax.random.PRNGKey(0)
    kx, kp = jax.random.split(key)

    B = 300  # deliberately NOT a tile multiple: exercises padding + 2-step grid
    x = jax.random.normal(kx, (B, IN_FEATURES), jnp.float32)
    params = init_params(kp)

    fwd = jax.jit(lambda xx: net_forward(xx, params))
    out = jax.block_until_ready(fwd(x))
    assert out.shape == (B, OUT_FEATURES)
    assert bool(jnp.all(jnp.isfinite(out)))

    # Tight check vs a reference with the same bf16/f32 mixed-precision math.
    ref_mixed = net_forward_ref_mixed(x, params)
    assert jnp.allclose(out, ref_mixed, atol=2e-3, rtol=2e-3), \
        float(jnp.max(jnp.abs(out - ref_mixed)))
    # Loose check vs the pure-f32 PyTorch-equivalent forward (bf16 operand error).
    ref_f32 = net_forward_ref(x, params)
    assert jnp.allclose(out, ref_f32, atol=5e-2, rtol=5e-2), \
        float(jnp.max(jnp.abs(out - ref_f32)))

    print("KERNEL_OK")
</pallas_src>

<mosaic_0001>
module attributes {stable_mosaic.version = 11 : i64} {
  func.func @_mlp_kernel(%arg0: i32, %arg1: memref<13x256xbf16, #tpu.memory_space<vmem>>, %arg2: memref<64x13xbf16, #tpu.memory_space<vmem>>, %arg3: memref<64x64xbf16, #tpu.memory_space<vmem>>, %arg4: memref<64x64xbf16, #tpu.memory_space<vmem>>, %arg5: memref<64x5xf32, #tpu.memory_space<vmem>>, %arg6: memref<1x256xf32, #tpu.memory_space<vmem>>) attributes {dimension_semantics = [#tpu.dimension_semantics<parallel>], iteration_bounds = array<i64: 2>, scalar_prefetch = 0 : i64, scratch_operands = 0 : i64, tpu.core_type = #tpu.core_type<tc>, window_params = [{transform_indices = @transform_0, window_bounds = array<i64: 13, 256>}, {pipeline_mode = #tpu.pipeline_mode<synchronous>, transform_indices = @transform_1, window_bounds = array<i64: 64, 13>}, {pipeline_mode = #tpu.pipeline_mode<synchronous>, transform_indices = @transform_2, window_bounds = array<i64: 64, 64>}, {pipeline_mode = #tpu.pipeline_mode<synchronous>, transform_indices = @transform_3, window_bounds = array<i64: 64, 64>}, {pipeline_mode = #tpu.pipeline_mode<synchronous>, transform_indices = @transform_4, window_bounds = array<i64: 64, 5>}, {transform_indices = @transform_5, window_bounds = array<i64: 1, 256>}]} {
    %c0 = arith.constant 0 : index
    %c0_0 = arith.constant 0 : index
    %0 = vector.load %arg5[%c0, %c0_0] : memref<64x5xf32, #tpu.memory_space<vmem>>, vector<64x5xf32>
    %1 = vector.extract_strided_slice %0 {offsets = [0, 0], sizes = [64, 1], strides = [1, 1]} : vector<64x5xf32> to vector<64x1xf32>
    %2 = vector.extract_strided_slice %0 {offsets = [0, 1], sizes = [64, 1], strides = [1, 1]} : vector<64x5xf32> to vector<64x1xf32>
    %3 = vector.extract_strided_slice %0 {offsets = [0, 2], sizes = [64, 1], strides = [1, 1]} : vector<64x5xf32> to vector<64x1xf32>
    %4 = vector.extract_strided_slice %0 {offsets = [0, 3], sizes = [64, 1], strides = [1, 1]} : vector<64x5xf32> to vector<64x1xf32>
    %5 = vector.extract_strided_slice %0 {offsets = [0, 4], sizes = [1, 1], strides = [1, 1]} : vector<64x5xf32> to vector<1x1xf32>
    %c0_1 = arith.constant 0 : index
    %c0_2 = arith.constant 0 : index
    %6 = vector.load %arg1[%c0_1, %c0_2] : memref<13x256xbf16, #tpu.memory_space<vmem>>, vector<13x256xbf16>
    %c0_3 = arith.constant 0 : index
    %c0_4 = arith.constant 0 : index
    %7 = vector.load %arg2[%c0_3, %c0_4] : memref<64x13xbf16, #tpu.memory_space<vmem>>, vector<64x13xbf16>
    %cst = arith.constant dense<0.000000e+00> : vector<64x256xf32>
    %8 = tpu.matmul %7, %6, %cst {dimension_numbers = #tpu.dot_dimension_numbers<[1], [0], [0], [1], [0, 0, 1, 1], [], []>} : vector<64x13xbf16>, vector<13x256xbf16>, vector<64x256xf32> -> vector<64x256xf32>
    %9 = vector.broadcast %1 : vector<64x1xf32> to vector<64x256xf32>
    %10 = arith.addf %8, %9 : vector<64x256xf32>
    %cst_5 = arith.constant 0.000000e+00 : f32
    %11 = vector.broadcast %cst_5 : f32 to vector<64x256xf32>
    %12 = arith.maximumf %10, %11 : vector<64x256xf32>
    %c0_6 = arith.constant 0 : index
    %c0_7 = arith.constant 0 : index
    %13 = vector.load %arg3[%c0_6, %c0_7] : memref<64x64xbf16, #tpu.memory_space<vmem>>, vector<64x64xbf16>
    %14 = arith.truncf %12 : vector<64x256xf32> to vector<64x256xbf16>
    %cst_8 = arith.constant dense<0.000000e+00> : vector<64x256xf32>
    %15 = tpu.matmul %13, %14, %cst_8 {dimension_numbers = #tpu.dot_dimension_numbers<[1], [0], [0], [1], [0, 0, 1, 1], [], []>} : vector<64x64xbf16>, vector<64x256xbf16>, vector<64x256xf32> -> vector<64x256xf32>
    %16 = vector.broadcast %2 : vector<64x1xf32> to vector<64x256xf32>
    %17 = arith.addf %15, %16 : vector<64x256xf32>
    %cst_9 = arith.constant 0.000000e+00 : f32
    %18 = vector.broadcast %cst_9 : f32 to vector<64x256xf32>
    %19 = arith.maximumf %17, %18 : vector<64x256xf32>
    %c0_10 = arith.constant 0 : index
    %c0_11 = arith.constant 0 : index
    %20 = vector.load %arg4[%c0_10, %c0_11] : memref<64x64xbf16, #tpu.memory_space<vmem>>, vector<64x64xbf16>
    %21 = arith.truncf %19 : vector<64x256xf32> to vector<64x256xbf16>
    %cst_12 = arith.constant dense<0.000000e+00> : vector<64x256xf32>
    %22 = tpu.matmul %20, %21, %cst_12 {dimension_numbers = #tpu.dot_dimension_numbers<[1], [0], [0], [1], [0, 0, 1, 1], [], []>} : vector<64x64xbf16>, vector<64x256xbf16>, vector<64x256xf32> -> vector<64x256xf32>
    %23 = vector.broadcast %3 : vector<64x1xf32> to vector<64x256xf32>
    %24 = arith.addf %22, %23 : vector<64x256xf32>
    %cst_13 = arith.constant 0.000000e+00 : f32
    %25 = vector.broadcast %cst_13 : f32 to vector<64x256xf32>
    %26 = arith.maximumf %24, %25 : vector<64x256xf32>
    %27 = vector.broadcast %4 : vector<64x1xf32> to vector<64x256xf32>
    %28 = arith.mulf %26, %27 : vector<64x256xf32>
    %cst_14 = arith.constant dense<0.000000e+00> : vector<256xf32>
    %29 = vector.multi_reduction <add>, %28, %cst_14 [0] : vector<64x256xf32> to vector<256xf32>
    %30 = vector.shape_cast %29 : vector<256xf32> to vector<1x256xf32>
    %31 = vector.broadcast %5 : vector<1x1xf32> to vector<1x256xf32>
    %32 = arith.addf %30, %31 : vector<1x256xf32>
    %c0_15 = arith.constant 0 : index
    %c0_16 = arith.constant 0 : index
    %33 = vector.load %arg6[%c0_15, %c0_16] : memref<1x256xf32, #tpu.memory_space<vmem>>, vector<1x256xf32>
    tpu.vector_store %arg6[%c0_15, %c0_16], %32 {strides = array<i32>} : memref<1x256xf32, #tpu.memory_space<vmem>>, vector<1x256xf32>,
    return
  }
  func.func @transform_0(%arg0: i32) -> (i32, i32) {
    %c0_i32 = arith.constant 0 : i32
    %c0_i32_0 = arith.constant 0 : i32
    return %c0_i32, %arg0 : i32, i32
  }
  func.func @transform_1(%arg0: i32) -> (i32, i32) {
    %c0_i32 = arith.constant 0 : i32
    %c0_i32_0 = arith.constant 0 : i32
    %c0_i32_1 = arith.constant 0 : i32
    return %c0_i32, %c0_i32_0 : i32, i32
  }
  func.func @transform_2(%arg0: i32) -> (i32, i32) {
    %c0_i32 = arith.constant 0 : i32
    %c0_i32_0 = arith.constant 0 : i32
    %c0_i32_1 = arith.constant 0 : i32
    return %c0_i32, %c0_i32_0 : i32, i32
  }
  func.func @transform_3(%arg0: i32) -> (i32, i32) {
    %c0_i32 = arith.constant 0 : i32
    %c0_i32_0 = arith.constant 0 : i32
    %c0_i32_1 = arith.constant 0 : i32
    return %c0_i32, %c0_i32_0 : i32, i32
  }
  func.func @transform_4(%arg0: i32) -> (i32, i32) {
    %c0_i32 = arith.constant 0 : i32
    %c0_i32_0 = arith.constant 0 : i32
    %c0_i32_1 = arith.constant 0 : i32
    return %c0_i32, %c0_i32_0 : i32, i32
  }
  func.func @transform_5(%arg0: i32) -> (i32, i32) {
    %c0_i32 = arith.constant 0 : i32
    %c0_i32_0 = arith.constant 0 : i32
    return %c0_i32, %arg0 : i32, i32
  }
}

</mosaic_0001>

<llo_original>
// kernel: _lambda_.1
$region0: #{_lambda_.1}
  #allocation0 [shape = 'u32[]', space=smem, size = 0x4, offset = 0x4, fixed_abs, tag = 'smem constant byte address 0x4 - core index']
  #allocation1 [shape = 'u32[72,128]{1,0:T(1,128)}', space=vmem, size = 0x9000, scoped, tag = 'internal scratch']
  %s0 = inlined_call_operand.vmem [shape: bf16[13,512], index: 0, kind: input, shape index: {}]
  %s1 = inlined_call_operand.vmem [shape: bf16[64,13], index: 1, kind: input, shape index: {}]
  %s2 = inlined_call_operand.vmem [shape: bf16[64,64], index: 2, kind: input, shape index: {}]
  %s3 = inlined_call_operand.vmem [shape: bf16[64,64], index: 3, kind: input, shape index: {}]
  %s4 = inlined_call_operand.vmem [shape: f32[64,5], index: 4, kind: input, shape index: {}]
  %s5 = inlined_call_operand.vmem [shape: f32[1,512], index: 5, kind: output, shape index: {}]
  %s6 = sld [smem:[#allocation0]]
  $region91: #{_lambda_.1} parent=0
    _
  %s8 = ssub.s32 1, %s6
  %s9 = scalar_select 0, %s8, %s6
  $region1: #{_lambda_.1} parent=0
    #allocation2 [shape = 'u8[16384]{0}', space=vmem, size = 0x4000, scoped, tag = 'input window, operand 0']
    loop: start=0, step=1, limit=4
    $region2: #{_lambda_.1} parent=1 // loop_pre_header
      _
    $region3: #{_lambda_.1} parent=1 // loop_header
      %s11 = sphi 0, %s15
      %p12 = scmp.ge.s32.totalorder %s11, 4
      %s21 = sphi 0, %s23
      %s24 = sphi 0, %s21
      %s25 = sphi 0, %s24
      %s41 = sphi 0, %s25
      %s45 = sphi 0, %s45
      %s47 = sphi 0, %s45
      %s48 = sphi 0, %s47
      %s62 = sphi 0, %s48
      %s66 = sphi 0, %s66
      %s68 = sphi 0, %s66
      %s69 = sphi 0, %s68
      %s83 = sphi 0, %s69
      %s87 = sphi 0, %s87
      %s89 = sphi 0, %s87
      %s90 = sphi 0, %s89
      %s104 = sphi 0, %s90
      %s108 = sphi 0, %s108
      %s110 = sphi 0, %s108
      %s111 = sphi 0, %s110
      %s125 = sphi 0, %s111
      %s131 = sphi 0, %s133
      %s134 = sphi 0, %s131
      %s135 = sphi 0, %s134
      %s151 = sphi 0, %s135
    $region4: #{_lambda_.1} parent=1 // loop_header_branch
      %14 = sbr.rel (%p12) target = $region8
    $region5: #{_lambda_.1} parent=1 // loop_body
      %s16 = ssub.s32 %s11, 1
      %s17 = ssub.s32 %s11, 2
      %s18 = sadd.s32 %s11, 1
      %s19 = ssub.s32 %s11, %s18
      %p20 = scmp.eq.s32.totalorder %s19, 0
      %s22 = sadd.s32 %s21, 1
      %s23 = scalar_select %p20, %s21, %s22
      %p26 = pneg %p20
      %p27 = scmp.eq.s32.totalorder %s11, 1
      %p28 = por %p26, %p27
      %p29 = scmp.ne.s32.totalorder %s21, %s24
      %p30 = scmp.eq.s32.totalorder %s11, 0
      %p31 = por %p29, %p30
      %p32 = scmp.ne.s32.totalorder %s21, %s24
      %p33 = scmp.eq.s32.totalorder %s16, 1
      %p34 = por %p32, %p33
      %p35 = scmp.ne.s32.totalorder %s24, %s25
      %p36 = scmp.eq.s32.totalorder %s16, 0
      %p37 = por %p35, %p36
      %p38 = scmp.ne.s32.totalorder %s24, %s25
      %p39 = scmp.eq.s32.totalorder %s17, 1
      %p40 = por %p38, %p39
      %p42 = scmp.ne.s32.totalorder %s25, %s41
      %p43 = scmp.eq.s32.totalorder %s17, 0
      %p44 = por %p42, %p43
      %s46 = sadd.s32 %s45, 1
      %p49 = scmp.eq.s32.totalorder %s11, 1
      %p50 = scmp.ne.s32.totalorder %s45, %s47
      %p51 = scmp.eq.s32.totalorder %s11, 0
      %p52 = por %p50, %p51
      %p53 = scmp.ne.s32.totalorder %s45, %s47
      %p54 = scmp.eq.s32.totalorder %s16, 1
      %p55 = por %p53, %p54
      %p56 = scmp.ne.s32.totalorder %s47, %s48
      %p57 = scmp.eq.s32.totalorder %s16, 0
      %p58 = por %p56, %p57
      %p59 = scmp.ne.s32.totalorder %s47, %s48
      %p60 = scmp.eq.s32.totalorder %s17, 1
      %p61 = por %p59, %p60
      %p63 = scmp.ne.s32.totalorder %s48, %s62
      %p64 = scmp.eq.s32.totalorder %s17, 0
      %p65 = por %p63, %p64
      %s67 = sadd.s32 %s66, 1
      %p70 = scmp.eq.s32.totalorder %s11, 1
      %p71 = scmp.ne.s32.totalorder %s66, %s68
      %p72 = scmp.eq.s32.totalorder %s11, 0
      %p73 = por %p71, %p72
      %p74 = scmp.ne.s32.totalorder %s66, %s68
      %p75 = scmp.eq.s32.totalorder %s16, 1
      %p76 = por %p74, %p75
      %p77 = scmp.ne.s32.totalorder %s68, %s69
      %p78 = scmp.eq.s32.totalorder %s16, 0
      %p79 = por %p77, %p78
      %p80 = scmp.ne.s32.totalorder %s68, %s69
      %p81 = scmp.eq.s32.totalorder %s17, 1
      %p82 = por %p80, %p81
      %p84 = scmp.ne.s32.totalorder %s69, %s83
      %p85 = scmp.eq.s32.totalorder %s17, 0
      %p86 = por %p84, %p85
      %s88 = sadd.s32 %s87, 1
      %p91 = scmp.eq.s32.totalorder %s11, 1
      %p92 = scmp.ne.s32.totalorder %s87, %s89
      %p93 = scmp.eq.s32.totalorder %s11, 0
      %p94 = por %p92, %p93
      %p95 = scmp.ne.s32.totalorder %s87, %s89
      %p96 = scmp.eq.s32.totalorder %s16, 1
      %p97 = por %p95, %p96
      %p98 = scmp.ne.s32.totalorder %s89, %s90
      %p99 = scmp.eq.s32.totalorder %s16, 0
      %p100 = por %p98, %p99
      %p101 = scmp.ne.s32.totalorder %s89, %s90
      %p102 = scmp.eq.s32.totalorder %s17, 1
      %p103 = por %p101, %p102
      %p105 = scmp.ne.s32.totalorder %s90, %s104
      %p106 = scmp.eq.s32.totalorder %s17, 0
      %p107 = por %p105, %p106
      %s109 = sadd.s32 %s108, 1
      %p112 = scmp.eq.s32.totalorder %s11, 1
      %p113 = scmp.ne.s32.totalorder %s108, %s110
      %p114 = scmp.eq.s32.totalorder %s11, 0
      %p115 = por %p113, %p114
      %p116 = scmp.ne.s32.totalorder %s108, %s110
      %p117 = scmp.eq.s32.totalorder %s16, 1
      %p118 = por %p116, %p117
      %p119 = scmp.ne.s32.totalorder %s110, %s111
      %p120 = scmp.eq.s32.totalorder %s16, 0
      %p121 = por %p119, %p120
      %p122 = scmp.ne.s32.totalorder %s110, %s111
      %p123 = scmp.eq.s32.totalorder %s17, 1
      %p124 = por %p122, %p123
      %p126 = scmp.ne.s32.totalorder %s111, %s125
      %p127 = scmp.eq.s32.totalorder %s17, 0
      %p128 = por %p126, %p127
      %s129 = ssub.s32 %s11, %s18
      %p130 = scmp.eq.s32.totalorder %s129, 0
      %s132 = sadd.s32 %s131, 1
      %s133 = scalar_select %p130, %s131, %s132
      %p136 = pneg %p130
      %p137 = scmp.eq.s32.totalorder %s11, 1
      %p138 = por %p136, %p137
      %p139 = scmp.ne.s32.totalorder %s131, %s134
      %p140 = scmp.eq.s32.totalorder %s11, 0
      %p141 = por %p139, %p140
      %p142 = scmp.ne.s32.totalorder %s131, %s134
      %p143 = scmp.eq.s32.totalorder %s16, 1
      %p144 = por %p142, %p143
      %p145 = scmp.ne.s32.totalorder %s134, %s135
      %p146 = scmp.eq.s32.totalorder %s16, 0
      %p147 = por %p145, %p146
      %p148 = scmp.ne.s32.totalorder %s134, %s135
      %p149 = scmp.eq.s32.totalorder %s17, 1
      %p150 = por %p148, %p149
      %p152 = scmp.ne.s32.totalorder %s135, %s151
      %p153 = scmp.eq.s32.totalorder %s17, 0
      %p154 = por %p152, %p153
      %p155 = scmp.le.s32.totalorder 1, %s11
      %p156 = scmp.lt.s32.totalorder %s11, 3
      %p157 = pnand %p155, %p156
      %p158 = pneg %p157
      // Predicated region
      $region9: #{_lambda_.1} parent=5 // pred_check
        _
      $region10: #{_lambda_.1} parent=5 // pred_check_branch
        %160 = sbr.rel (%p157) target = $region12
      $region11: #{_lambda_.1} parent=5 // pred_region
        %s161 = ssub.s32 %s11, 1
        // Predicated region
        $region13: #{_lambda_.1} parent=11 // pred_check
          %p162 = pneg %p58
        $region14: #{_lambda_.1} parent=11 // pred_check_branch
          %164 = sbr.rel (%p162) target = $region16
        $region15: #{_lambda_.1} parent=11 // pred_region
          _
        $region16: #{_lambda_.1} parent=11 // pred_fallthru
          _
        // Predicated region
        $region17: #{_lambda_.1} parent=11 // pred_check
          %p165 = pneg %p79
        $region18: #{_lambda_.1} parent=11 // pred_check_branch
          %167 = sbr.rel (%p165) target = $region20
        $region19: #{_lambda_.1} parent=11 // pred_region
          _
        $region20: #{_lambda_.1} parent=11 // pred_fallthru
          _
        // Predicated region
        $region21: #{_lambda_.1} parent=11 // pred_check
          %p168 = pneg %p100
        $region22: #{_lambda_.1} parent=11 // pred_check_branch
          %170 = sbr.rel (%p168) target = $region24
        $region23: #{_lambda_.1} parent=11 // pred_region
          _
        $region24: #{_lambda_.1} parent=11 // pred_fallthru
          _
        // Predicated region
        $region25: #{_lambda_.1} parent=11 // pred_check
          %p171 = pneg %p121
        $region26: #{_lambda_.1} parent=11 // pred_check_branch
          %173 = sbr.rel (%p171) target = $region28
        $region27: #{_lambda_.1} parent=11 // pred_region
          _
        $region28: #{_lambda_.1} parent=11 // pred_fallthru
          _
      $region12: #{_lambda_.1} parent=5 // pred_fallthru
        _
      %p174 = scmp.lt.s32.totalorder %s11, 2
      // Predicated region
      $region29: #{_lambda_.1} parent=5 // pred_check
        %p175 = pneg %p174
      $region30: #{_lambda_.1} parent=5 // pred_check_branch
        %177 = sbr.rel (%p175) target = $region32
      $region31: #{_lambda_.1} parent=5 // pred_region
        // Predicated region
        $region33: #{_lambda_.1} parent=31 // pred_check
          %p178 = pneg %p31
        $region34: #{_lambda_.1} parent=31 // pred_check_branch
          %180 = sbr.rel (%p178) target = $region36
        $region35: #{_lambda_.1} parent=31 // pred_region
          %s181 = sand.u32 %s21, 1
          %s182 = sand.u32 %s21, 1
          %s183 = smul.addr %s182, 16
          %s184 = scalar_lea.vmem [#allocation2], %s183
          %s185 = smul.u32 2, %s11
          %s186 = smul.addr %s185, 4
          %s187 = scalar_lea.vmem %s0, %s186
          // Predicated region
          $region37: #{_lambda_.1} parent=35 // pred_check
            _
          $region38: #{_lambda_.1} parent=35 // pred_check_branch
            %189 = sbr.rel (0) target = $region40
          $region39: #{_lambda_.1} parent=35 // pred_region
            // Predicated region
            $region41: #{_lambda_.1} parent=39 // pred_check
              _
            $region42: #{_lambda_.1} parent=39 // pred_check_branch
              %191 = sbr.rel (0) target = $region44
            $region43: #{_lambda_.1} parent=39 // pred_region
              // Predicated region
              $region56: #{_lambda_.1} parent=43 // pred_check
                _
              $region57: #{_lambda_.1} parent=43 // pred_check_branch
                %209 = sbr.rel (0) target = $region59
              $region58: #{_lambda_.1} parent=43 // pred_region
                loop: start=0, step=1, limit=1
                $region60: #{_lambda_.1} parent=58 // loop_pre_header
                  _
                $region61: #{_lambda_.1} parent=58 // loop_header
                  %s211 = sphi 0, %s215
                  %p212 = scmp.ge.s32.totalorder %s211, 1
                  %s216 = sphi %s187, %s187
                  %s217 = sphi %s184, %s184
                $region62: #{_lambda_.1} parent=58 // loop_header_branch
                  %214 = sbr.rel (%p212) target = $region66
                $region63: #{_lambda_.1} parent=58 // loop_body
                  %v218 = vld [vmem:[%s216] sm:$0xff]
                  %219 = vst [vmem:[%s217] sm:$0xff] %v218
                  %v220 = vld [vmem:[%s216 + $0x10] sm:$0xff]
                  %221 = vst [vmem:[%s217 + $0x8] sm:$0xff] %v220
                $region64: #{_lambda_.1} parent=58 // loop_footer
                  %s215 = sadd.s32 1, %s211
                $region65: #{_lambda_.1} parent=58 // loop_footer_branch
                  %210 = sbr.rel target = $region61
                $region66: #{_lambda_.1} parent=58 // loop_exit
                  _
              $region59: #{_lambda_.1} parent=43 // pred_fallthru
                _
              // Predicated region
              $region67: #{_lambda_.1} parent=43 // pred_check
                _
              $region68: #{_lambda_.1} parent=43 // pred_check_branch
                %223 = sbr.rel target = $region70
              $region69: #{_lambda_.1} parent=43 // pred_region
                _
              $region70: #{_lambda_.1} parent=43 // pred_fallthru
                _
            $region44: #{_lambda_.1} parent=39 // pred_fallthru
              _
            // Predicated region
            $region45: #{_lambda_.1} parent=39 // pred_check
              _
            $region46: #{_lambda_.1} parent=39 // pred_check_branch
              %193 = sbr.rel target = $region48
            $region47: #{_lambda_.1} parent=39 // pred_region
              %s195 = ssub.s32 256, 1
              loop: start=0, step=1, limit=1
              $region49: #{_lambda_.1} parent=47 // loop_pre_header
                _
              $region50: #{_lambda_.1} parent=47 // loop_header
                %s197 = sphi 0, %s201
                %p198 = scmp.ge.s32.totalorder %s197, 1
                %s202 = sphi %s187, %s187
                %s203 = sphi %s184, %s184
              $region51: #{_lambda_.1} parent=47 // loop_header_branch
                %200 = sbr.rel (%p198) target = $region55
              $region52: #{_lambda_.1} parent=47 // loop_body
                %v204 = vld [vmem:[%s202] sm:%s195]
                %205 = vst [vmem:[%s203] sm:%s195] %v204
                %v206 = vld [vmem:[%s202 + $0x10] sm:%s195]
                %207 = vst [vmem:[%s203 + $0x8] sm:%s195] %v206
              $region53: #{_lambda_.1} parent=47 // loop_footer
                %s201 = sadd.s32 1, %s197
              $region54: #{_lambda_.1} parent=47 // loop_footer_branch
                %196 = sbr.rel target = $region50
              $region55: #{_lambda_.1} parent=47 // loop_exit
                _
            $region48: #{_lambda_.1} parent=39 // pred_fallthru
              _
          $region40: #{_lambda_.1} parent=35 // pred_fallthru
            _
          %224 = vnop
        $region36: #{_lambda_.1} parent=31 // pred_fallthru
          _
      $region32: #{_lambda_.1} parent=5 // pred_fallthru
        _
      %p225 = scmp.le.s32.totalorder 1, %s11
      %p226 = scmp.lt.s32.totalorder %s11, 3
      %p227 = pnand %p225, %p226
      %p228 = pneg %p227
      // Predicated region
      $region71: #{_lambda_.1} parent=5 // pred_check
        _
      $region72: #{_lambda_.1} parent=5 // pred_check_branch
        %230 = sbr.rel (%p227) target = $region74
      $region73: #{_lambda_.1} parent=5 // pred_region
        %s231 = ssub.s32 %s11, 1
        %s232 = sand.u32 %s24, 1
        %s233 = sand.u32 %s24, 1
        %s234 = smul.addr %s233, 16
        %s235 = scalar_lea.vmem [#allocation2], %s234
        // Predicated region
        $region75: #{_lambda_.1} parent=73 // pred_check
          %p236 = pneg %p37
        $region76: #{_lambda_.1} parent=73 // pred_check_branch
          %238 = sbr.rel (%p236) target = $region78
        $region77: #{_lambda_.1} parent=73 // pred_region
          _
        $region78: #{_lambda_.1} parent=73 // pred_fallthru
          _
        %s239 = sand.u32 %s24, 1
        %s240 = sand.u32 %s24, 1
        %s241 = smul.addr %s240, 16
        %s242 = scalar_lea.vmem [#allocation2], %s241
        %p243 = pneg %p37
        %p244 = pneg %p34
        %p245 = pneg %p58
        %p246 = pneg %p55
        %p247 = pneg %p79
        %p248 = pneg %p76
        %p249 = pneg %p100
        %p250 = pneg %p97
        %p251 = pneg %p121
        %p252 = pneg %p118
        %p253 = pneg %p147
        %p254 = pneg %p144
        %s255 = smul.u32 2, %s16
        %p256 = scmp.lt.s32.totalorder %s255, 3
        %s257 = scalar_select %p256, %s255, 3
        %s258 = scalar_lea.vmem %s5, %s257
        %s259 = smul.u32 2, %s16
        %s260 = smul.u32 2, %s16
        %p261 = scmp.lt.s32.totalorder %s260, 3
        %s262 = scalar_select %p261, %s260, 3
        %s263 = scalar_lea.vmem %s5, %s262
        %s264 = smul.u32 2, %s16
        %v266 = vld [vmem:[%s4] sm:$0xff]
        %v267 = vld [vmem:[%s4 + $0x8] sm:$0xff]
        %v268 = vld [vmem:[%s4 + $0x10] sm:$0xff]
        %v269 = vld [vmem:[%s4 + $0x18] sm:$0xff]
        %v270 = vld [vmem:[%s4 + $0x20] sm:$0xff]
        %v271 = vld [vmem:[%s4 + $0x28] sm:$0xff]
        %v272 = vld [vmem:[%s4 + $0x30] sm:$0xff]
        %v273 = vld [vmem:[%s4 + $0x38] sm:$0xff]
        %v274 = vld [vmem:[%s235] sm:$0xff]
        %v275 = vld [vmem:[%s235 + $0x8] sm:$0x77]
        %v276 = vld [vmem:[%s1] sm:$0xf]
        %v277 = vld [vmem:[%s1 + $0x4] sm:$0xf]
        %v278 = vld [vmem:[%s1 + $0x8] sm:$0xf]
        %v279 = vld [vmem:[%s1 + $0xc] sm:$0xf]
        %v280 = vld [vmem:[%s1 + $0x10] sm:$0xf]
        %v281 = vld [vmem:[%s1 + $0x14] sm:$0xf]
        %v282 = vld [vmem:[%s1 + $0x18] sm:$0xf]
        %v283 = vld [vmem:[%s1 + $0x1c] sm:$0xf]
        %285 = vset.pattern.permute.xlu0 0
        %286 = vperm.xlu0 %285, %v266
        %v287 = vpop.permute.xlu0 %286
        %290 = vset.pattern.permute.xlu0 0
        %291 = vperm.xlu0 %290, %v267
        %v292 = vpop.permute.xlu0 %291
        %295 = vset.pattern.permute.xlu0 0
        %296 = vperm.xlu0 %295, %v268
        %v297 = vpop.permute.xlu0 %296
        %300 = vset.pattern.permute.xlu0 0
        %301 = vperm.xlu0 %300, %v269
        %v302 = vpop.permute.xlu0 %301
        %305 = vset.pattern.permute.xlu0 0
        %306 = vperm.xlu0 %305, %v270
        %v307 = vpop.permute.xlu0 %306
        %310 = vset.pattern.permute.xlu0 0
        %311 = vperm.xlu0 %310, %v271
        %v312 = vpop.permute.xlu0 %311
        %315 = vset.pattern.permute.xlu0 0
        %316 = vperm.xlu0 %315, %v272
        %v317 = vpop.permute.xlu0 %316
        %320 = vset.pattern.permute.xlu0 0
        %321 = vperm.xlu0 %320, %v273
        %v322 = vpop.permute.xlu0 %321
        %v332 = vunpack.c.l.b16 %v276
        %v333 = vunpack.c.l.b16 %v277
        %v334 = vunpack.c.l.b16 %v278
        %v335 = vunpack.c.l.b16 %v279
        %v336 = vunpack.c.l.b16 %v280
        %v337 = vunpack.c.l.b16 %v281
        %v338 = vunpack.c.l.b16 %v282
        %v339 = vunpack.c.l.b16 %v283
        %v340 = vpack.c.b16 %v333, %v332
        %v341 = vpack.c.b16 %v335, %v334
        %v342 = vpack.c.b16 %v337, %v336
        %v343 = vpack.c.b16 %v339, %v338
        %v346 = vunpack.c.l.b16 %v274
        %v347 = vunpack.c.h.b16 %v274
        %v348 = vunpack.c.l.b16 %v275
        %v349 = vunpack.c.h.b16 %v275
        %v350 = vpack.c.b16 %v348, %v346
        %v351 = vpack.c.b16 %v349, %v347
        %vm352 = vcmask 105472
        %v354 = vsel %vm352, %v340, 0
        %v357 = vsel %vm352, %v341, 0
        %v360 = vsel %vm352, %v342, 0
        %v363 = vsel %vm352, %v343, 0
        %vm365 = vcmask 1045504
        %vm366 = vcmask 1046528
        %v367 = vsel %vm365, 4294967295, 65535
        %v368 = vsel %vm366, %v367, 0
        %v370 = vand.u32 %v350, %v368
        %v373 = vand.u32 %v351, %v368
        %375 = vmatpush.bf16.msra.mxu0 0
        %376 = vmatpush.bf16.msra.mxu0 0
        %377 = vmatpush.bf16.msra.mxu0 0
        %378 = vmatpush.bf16.msra.mxu0 0
        %379 = vmatpush.bf16.msra.mxu0 0
        %380 = vmatpush.bf16.msra.mxu0 0
        %381 = vmatpush.bf16.msra.mxu0 0
        %382 = vmatpush.bf16.msra.mxu0 %v370
        %383 = vmatmul.bf16.gmra.mxu0 %v354
        %v384 = vpop.f32.mrf.mxu0
        %v385 = vadd.f32 %v287, %v384
        %v386 = vpop.f32.mrf.mxu0
        %v387 = vadd.f32 %v292, %v386
        %388 = vmatmul.bf16.gmra.mxu0 %v357
        %v389 = vpop.f32.mrf.mxu0
        %v390 = vadd.f32 %v297, %v389
        %v391 = vpop.f32.mrf.mxu0
        %v392 = vadd.f32 %v302, %v391
        %393 = vmatmul.bf16.gmra.mxu0 %v360
        %v394 = vpop.f32.mrf.mxu0
        %v395 = vadd.f32 %v307, %v394
        %v396 = vpop.f32.mrf.mxu0
        %v397 = vadd.f32 %v312, %v396
        %398 = vmatmul.bf16.gmra.mxu0 %v363
        %v399 = vpop.f32.mrf.mxu0
        %v400 = vadd.f32 %v317, %v399
        %v401 = vpop.f32.mrf.mxu0
        %v402 = vadd.f32 %v322, %v401
        %403 = vdwg.mxu0
        %404 = vmatpush.bf16.msra.mxu0 0
        %405 = vmatpush.bf16.msra.mxu0 0
        %406 = vmatpush.bf16.msra.mxu0 0
        %407 = vmatpush.bf16.msra.mxu0 0
        %408 = vmatpush.bf16.msra.mxu0 0
        %409 = vmatpush.bf16.msra.mxu0 0
        %410 = vmatpush.bf16.msra.mxu0 0
        %411 = vmatpush.bf16.msra.mxu0 %v373
        %412 = vmatmul.bf16.gmra.mxu0 %v354
        %v413 = vpop.f32.mrf.mxu0
        %v414 = vadd.f32 %v287, %v413
        %v415 = vpop.f32.mrf.mxu0
        %v416 = vadd.f32 %v292, %v415
        %417 = vmatmul.bf16.gmra.mxu0 %v357
        %v418 = vpop.f32.mrf.mxu0
        %v419 = vadd.f32 %v297, %v418
        %v420 = vpop.f32.mrf.mxu0
        %v421 = vadd.f32 %v302, %v420
        %422 = vmatmul.bf16.gmra.mxu0 %v360
        %v423 = vpop.f32.mrf.mxu0
        %v424 = vadd.f32 %v307, %v423
        %v425 = vpop.f32.mrf.mxu0
        %v426 = vadd.f32 %v312, %v425
        %427 = vmatmul.bf16.gmra.mxu0 %v363
        %v428 = vpop.f32.mrf.mxu0
        %v429 = vadd.f32 %v317, %v428
        %v430 = vpop.f32.mrf.mxu0
        %v431 = vadd.f32 %v322, %v430
        %432 = vdwg.mxu0
        %v433 = vmax.f32 %v385, 0.0
        %v434 = vmax.f32 %v414, 0.0
        %v435 = vmax.f32 %v387, 0.0
        %v436 = vmax.f32 %v416, 0.0
        %v437 = vmax.f32 %v390, 0.0
        %v438 = vmax.f32 %v419, 0.0
        %v439 = vmax.f32 %v392, 0.0
        %v440 = vmax.f32 %v421, 0.0
        %v441 = vmax.f32 %v395, 0.0
        %v442 = vmax.f32 %v424, 0.0
        %v443 = vmax.f32 %v397, 0.0
        %v444 = vmax.f32 %v426, 0.0
        %v445 = vmax.f32 %v400, 0.0
        %v446 = vmax.f32 %v429, 0.0
        %v447 = vmax.f32 %v402, 0.0
        %v448 = vmax.f32 %v431, 0.0
        %v449 = vld [vmem:[%s2] sm:$0xf]
        %v450 = vld [vmem:[%s2 + $0x4] sm:$0xf]
        %v451 = vld [vmem:[%s2 + $0x8] sm:$0xf]
        %v452 = vld [vmem:[%s2 + $0xc] sm:$0xf]
        %v453 = vld [vmem:[%s2 + $0x10] sm:$0xf]
        %v454 = vld [vmem:[%s2 + $0x14] sm:$0xf]
        %v455 = vld [vmem:[%s2 + $0x18] sm:$0xf]
        %v456 = vld [vmem:[%s2 + $0x1c] sm:$0xf]
        %v457 = vpack.c.bf16 %v435, %v433
        %v458 = vpack.c.bf16 %v436, %v434
        %v459 = vpack.c.bf16 %v439, %v437
        %v460 = vpack.c.bf16 %v440, %v438
        %v461 = vpack.c.bf16 %v443, %v441
        %v462 = vpack.c.bf16 %v444, %v442
        %v463 = vpack.c.bf16 %v447, %v445
        %v464 = vpack.c.bf16 %v448, %v446
        %465 = vset.pattern.permute.xlu0 1
        %466 = vperm.xlu0 %465, %v266
        %v467 = vpop.permute.xlu0 %466
        %469 = vset.pattern.permute.xlu0 1
        %470 = vperm.xlu0 %469, %v267
        %v471 = vpop.permute.xlu0 %470
        %473 = vset.pattern.permute.xlu0 1
        %474 = vperm.xlu0 %473, %v268
        %v475 = vpop.permute.xlu0 %474
        %477 = vset.pattern.permute.xlu0 1
        %478 = vperm.xlu0 %477, %v269
        %v479 = vpop.permute.xlu0 %478
        %481 = vset.pattern.permute.xlu0 1
        %482 = vperm.xlu0 %481, %v270
        %v483 = vpop.permute.xlu0 %482
        %485 = vset.pattern.permute.xlu0 1
        %486 = vperm.xlu0 %485, %v271
        %v487 = vpop.permute.xlu0 %486
        %489 = vset.pattern.permute.xlu0 1
        %490 = vperm.xlu0 %489, %v272
        %v491 = vpop.permute.xlu0 %490
        %493 = vset.pattern.permute.xlu0 1
        %494 = vperm.xlu0 %493, %v273
        %v495 = vpop.permute.xlu0 %494
        %v505 = vunpack.c.l.b16 %v449
        %v506 = vunpack.c.l.b16 %v450
        %v507 = vunpack.c.l.b16 %v451
        %v508 = vunpack.c.l.b16 %v452
        %v509 = vunpack.c.l.b16 %v453
        %v510 = vunpack.c.l.b16 %v454
        %v511 = vunpack.c.l.b16 %v455
        %v512 = vunpack.c.l.b16 %v456
        %v513 = vpack.c.b16 %v506, %v505
        %v514 = vpack.c.b16 %v508, %v507
        %v515 = vpack.c.b16 %v510, %v509
        %v516 = vpack.c.b16 %v512, %v511
        %vm517 = vcmask 523264
        %v519 = vsel %vm517, %v513, 0
        %v522 = vsel %vm517, %v514, 0
        %v525 = vsel %vm517, %v515, 0
        %v528 = vsel %vm517, %v516, 0
        %530 = vmatpush.bf16.msra.mxu0 0
        %531 = vmatpush.bf16.msra.mxu0 0
        %532 = vmatpush.bf16.msra.mxu0 0
        %533 = vmatpush.bf16.msra.mxu0 0
        %534 = vmatpush.bf16.msra.mxu0 %v463
        %535 = vmatpush.bf16.msra.mxu0 %v461
        %536 = vmatpush.bf16.msra.mxu0 %v459
        %537 = vmatpush.bf16.msra.mxu0 %v457
        %538 = vmatmul.bf16.gmra.mxu0 %v519
        %v539 = vpop.f32.mrf.mxu0
        %v540 = vadd.f32 %v467, %v539
        %v541 = vpop.f32.mrf.mxu0
        %v542 = vadd.f32 %v471, %v541
        %543 = vmatmul.bf16.gmra.mxu0 %v522
        %v544 = vpop.f32.mrf.mxu0
        %v545 = vadd.f32 %v475, %v544
        %v546 = vpop.f32.mrf.mxu0
        %v547 = vadd.f32 %v479, %v546
        %548 = vmatmul.bf16.gmra.mxu0 %v525
        %v549 = vpop.f32.mrf.mxu0
        %v550 = vadd.f32 %v483, %v549
        %v551 = vpop.f32.mrf.mxu0
        %v552 = vadd.f32 %v487, %v551
        %553 = vmatmul.bf16.gmra.mxu0 %v528
        %v554 = vpop.f32.mrf.mxu0
        %v555 = vadd.f32 %v491, %v554
        %v556 = vpop.f32.mrf.mxu0
        %v557 = vadd.f32 %v495, %v556
        %558 = vdwg.mxu0
        %559 = vmatpush.bf16.msra.mxu0 0
        %560 = vmatpush.bf16.msra.mxu0 0
        %561 = vmatpush.bf16.msra.mxu0 0
        %562 = vmatpush.bf16.msra.mxu0 0
        %563 = vmatpush.bf16.msra.mxu0 %v464
        %564 = vmatpush.bf16.msra.mxu0 %v462
        %565 = vmatpush.bf16.msra.mxu0 %v460
        %566 = vmatpush.bf16.msra.mxu0 %v458
        %567 = vmatmul.bf16.gmra.mxu0 %v519
        %v568 = vpop.f32.mrf.mxu0
        %v569 = vadd.f32 %v467, %v568
        %v570 = vpop.f32.mrf.mxu0
        %v571 = vadd.f32 %v471, %v570
        %572 = vmatmul.bf16.gmra.mxu0 %v522
        %v573 = vpop.f32.mrf.mxu0
        %v574 = vadd.f32 %v475, %v573
        %v575 = vpop.f32.mrf.mxu0
        %v576 = vadd.f32 %v479, %v575
        %577 = vmatmul.bf16.gmra.mxu0 %v525
        %v578 = vpop.f32.mrf.mxu0
        %v579 = vadd.f32 %v483, %v578
        %v580 = vpop.f32.mrf.mxu0
        %v581 = vadd.f32 %v487, %v580
        %582 = vmatmul.bf16.gmra.mxu0 %v528
        %v583 = vpop.f32.mrf.mxu0
        %v584 = vadd.f32 %v491, %v583
        %v585 = vpop.f32.mrf.mxu0
        %v586 = vadd.f32 %v495, %v585
        %587 = vdwg.mxu0
        %v588 = vmax.f32 %v540, 0.0
        %v589 = vmax.f32 %v569, 0.0
        %v590 = vmax.f32 %v542, 0.0
        %v591 = vmax.f32 %v571, 0.0
        %v592 = vmax.f32 %v545, 0.0
        %v593 = vmax.f32 %v574, 0.0
        %v594 = vmax.f32 %v547, 0.0
        %v595 = vmax.f32 %v576, 0.0
        %v596 = vmax.f32 %v550, 0.0
        %v597 = vmax.f32 %v579, 0.0
        %v598 = vmax.f32 %v552, 0.0
        %v599 = vmax.f32 %v581, 0.0
        %v600 = vmax.f32 %v555, 0.0
        %v601 = vmax.f32 %v584, 0.0
        %v602 = vmax.f32 %v557, 0.0
        %v603 = vmax.f32 %v586, 0.0
        %v604 = vld [vmem:[%s3] sm:$0xf]
        %v605 = vld [vmem:[%s3 + $0x4] sm:$0xf]
        %v606 = vld [vmem:[%s3 + $0x8] sm:$0xf]
        %v607 = vld [vmem:[%s3 + $0xc] sm:$0xf]
        %v608 = vld [vmem:[%s3 + $0x10] sm:$0xf]
        %v609 = vld [vmem:[%s3 + $0x14] sm:$0xf]
        %v610 = vld [vmem:[%s3 + $0x18] sm:$0xf]
        %v611 = vld [vmem:[%s3 + $0x1c] sm:$0xf]
        %v612 = vpack.c.bf16 %v590, %v588
        %v613 = vpack.c.bf16 %v591, %v589
        %v614 = vpack.c.bf16 %v594, %v592
        %v615 = vpack.c.bf16 %v595, %v593
        %v616 = vpack.c.bf16 %v598, %v596
        %v617 = vpack.c.bf16 %v599, %v597
        %v618 = vpack.c.bf16 %v602, %v600
        %v619 = vpack.c.bf16 %v603, %v601
        %620 = vset.pattern.permute.xlu0 2
        %621 = vperm.xlu0 %620, %v266
        %v622 = vpop.permute.xlu0 %621
        %624 = vset.pattern.permute.xlu0 2
        %625 = vperm.xlu0 %624, %v267
        %v626 = vpop.permute.xlu0 %625
        %628 = vset.pattern.permute.xlu0 2
        %629 = vperm.xlu0 %628, %v268
        %v630 = vpop.permute.xlu0 %629
        %632 = vset.pattern.permute.xlu0 2
        %633 = vperm.xlu0 %632, %v269
        %v634 = vpop.permute.xlu0 %633
        %636 = vset.pattern.permute.xlu0 2
        %637 = vperm.xlu0 %636, %v270
        %v638 = vpop.permute.xlu0 %637
        %640 = vset.pattern.permute.xlu0 2
        %641 = vperm.xlu0 %640, %v271
        %v642 = vpop.permute.xlu0 %641
        %644 = vset.pattern.permute.xlu0 2
        %645 = vperm.xlu0 %644, %v272
        %v646 = vpop.permute.xlu0 %645
        %648 = vset.pattern.permute.xlu0 2
        %649 = vperm.xlu0 %648, %v273
        %v650 = vpop.permute.xlu0 %649
        %v660 = vunpack.c.l.b16 %v604
        %v661 = vunpack.c.l.b16 %v605
        %v662 = vunpack.c.l.b16 %v606
        %v663 = vunpack.c.l.b16 %v607
        %v664 = vunpack.c.l.b16 %v608
        %v665 = vunpack.c.l.b16 %v609
        %v666 = vunpack.c.l.b16 %v610
        %v667 = vunpack.c.l.b16 %v611
        %v668 = vpack.c.b16 %v661, %v660
        %v669 = vpack.c.b16 %v663, %v662
        %v670 = vpack.c.b16 %v665, %v664
        %v671 = vpack.c.b16 %v667, %v666
        %v673 = vsel %vm517, %v668, 0
        %v676 = vsel %vm517, %v669, 0
        %v679 = vsel %vm517, %v670, 0
        %v682 = vsel %vm517, %v671, 0
        %684 = vmatpush.bf16.msra.mxu0 0
        %685 = vmatpush.bf16.msra.mxu0 0
        %686 = vmatpush.bf16.msra.mxu0 0
        %687 = vmatpush.bf16.msra.mxu0 0
        %688 = vmatpush.bf16.msra.mxu0 %v618
        %689 = vmatpush.bf16.msra.mxu0 %v616
        %690 = vmatpush.bf16.msra.mxu0 %v614
        %691 = vmatpush.bf16.msra.mxu0 %v612
        %692 = vmatmul.bf16.gmra.mxu0 %v673
        %v693 = vpop.f32.mrf.mxu0
        %v694 = vadd.f32 %v622, %v693
        %v695 = vpop.f32.mrf.mxu0
        %v696 = vadd.f32 %v626, %v695
        %697 = vmatmul.bf16.gmra.mxu0 %v676
        %v698 = vpop.f32.mrf.mxu0
        %v699 = vadd.f32 %v630, %v698
        %v700 = vpop.f32.mrf.mxu0
        %v701 = vadd.f32 %v634, %v700
        %702 = vmatmul.bf16.gmra.mxu0 %v679
        %v703 = vpop.f32.mrf.mxu0
        %v704 = vadd.f32 %v638, %v703
        %v705 = vpop.f32.mrf.mxu0
        %v706 = vadd.f32 %v642, %v705
        %707 = vmatmul.bf16.gmra.mxu0 %v682
        %v708 = vpop.f32.mrf.mxu0
        %v709 = vadd.f32 %v646, %v708
        %v710 = vpop.f32.mrf.mxu0
        %v711 = vadd.f32 %v650, %v710
        %712 = vdwg.mxu0
        %713 = vmatpush.bf16.msra.mxu0 0
        %714 = vmatpush.bf16.msra.mxu0 0
        %715 = vmatpush.bf16.msra.mxu0 0
        %716 = vmatpush.bf16.msra.mxu0 0
        %717 = vmatpush.bf16.msra.mxu0 %v619
        %718 = vmatpush.bf16.msra.mxu0 %v617
        %719 = vmatpush.bf16.msra.mxu0 %v615
        %720 = vmatpush.bf16.msra.mxu0 %v613
        %721 = vmatmul.bf16.gmra.mxu0 %v673
        %v722 = vpop.f32.mrf.mxu0
        %v723 = vadd.f32 %v622, %v722
        %v724 = vpop.f32.mrf.mxu0
        %v725 = vadd.f32 %v626, %v724
        %726 = vmatmul.bf16.gmra.mxu0 %v676
        %v727 = vpop.f32.mrf.mxu0
        %v728 = vadd.f32 %v630, %v727
        %v729 = vpop.f32.mrf.mxu0
        %v730 = vadd.f32 %v634, %v729
        %731 = vmatmul.bf16.gmra.mxu0 %v679
        %v732 = vpop.f32.mrf.mxu0
        %v733 = vadd.f32 %v638, %v732
        %v734 = vpop.f32.mrf.mxu0
        %v735 = vadd.f32 %v642, %v734
        %736 = vmatmul.bf16.gmra.mxu0 %v682
        %v737 = vpop.f32.mrf.mxu0
        %v738 = vadd.f32 %v646, %v737
        %v739 = vpop.f32.mrf.mxu0
        %v740 = vadd.f32 %v650, %v739
        %741 = vdwg.mxu0
        %v742 = vmax.f32 %v694, 0.0
        %v743 = vmax.f32 %v723, 0.0
        %v744 = vmax.f32 %v696, 0.0
        %v745 = vmax.f32 %v725, 0.0
        %v746 = vmax.f32 %v699, 0.0
        %v747 = vmax.f32 %v728, 0.0
        %v748 = vmax.f32 %v701, 0.0
        %v749 = vmax.f32 %v730, 0.0
        %v750 = vmax.f32 %v704, 0.0
        %v751 = vmax.f32 %v733, 0.0
        %v752 = vmax.f32 %v706, 0.0
        %v753 = vmax.f32 %v735, 0.0
        %v754 = vmax.f32 %v709, 0.0
        %v755 = vmax.f32 %v738, 0.0
        %v756 = vmax.f32 %v711, 0.0
        %v757 = vmax.f32 %v740, 0.0
        %758 = vset.pattern.permute.xlu0 3
        %759 = vperm.xlu0 %758, %v266
        %v760 = vpop.permute.xlu0 %759
        %762 = vset.pattern.permute.xlu0 3
        %763 = vperm.xlu0 %762, %v267
        %v764 = vpop.permute.xlu0 %763
        %766 = vset.pattern.permute.xlu0 3
        %767 = vperm.xlu0 %766, %v268
        %v768 = vpop.permute.xlu0 %767
        %770 = vset.pattern.permute.xlu0 3
        %771 = vperm.xlu0 %770, %v269
        %v772 = vpop.permute.xlu0 %771
        %774 = vset.pattern.permute.xlu0 3
        %775 = vperm.xlu0 %774, %v270
        %v776 = vpop.permute.xlu0 %775
        %778 = vset.pattern.permute.xlu0 3
        %779 = vperm.xlu0 %778, %v271
        %v780 = vpop.permute.xlu0 %779
        %782 = vset.pattern.permute.xlu0 3
        %783 = vperm.xlu0 %782, %v272
        %v784 = vpop.permute.xlu0 %783
        %786 = vset.pattern.permute.xlu0 3
        %787 = vperm.xlu0 %786, %v273
        %v788 = vpop.permute.xlu0 %787
        %v790 = vmul.f32 %v742, %v760
        %v791 = vmul.f32 %v743, %v760
        %v792 = vmul.f32 %v744, %v764
        %v793 = vmul.f32 %v745, %v764
        %v794 = vmul.f32 %v746, %v768
        %v795 = vmul.f32 %v747, %v768
        %v796 = vmul.f32 %v748, %v772
        %v797 = vmul.f32 %v749, %v772
        %v798 = vmul.f32 %v750, %v776
        %v799 = vmul.f32 %v751, %v776
        %v800 = vmul.f32 %v752, %v780
        %v801 = vmul.f32 %v753, %v780
        %v802 = vmul.f32 %v754, %v784
        %v803 = vmul.f32 %v755, %v784
        %v804 = vmul.f32 %v756, %v788
        %v805 = vmul.f32 %v757, %v788
        %v806 = vadd.f32 %v790, %v792
        %v807 = vadd.f32 %v806, %v794
        %v808 = vadd.f32 %v807, %v796
        %v809 = vadd.f32 %v808, %v798
        %v810 = vadd.f32 %v809, %v800
        %v811 = vadd.f32 %v810, %v802
        %v812 = vadd.f32 %v811, %v804
        %v813 = vrot.slane %v812, 4
        %v814 = vadd.f32 %v812, %v813
        %v815 = vrot.slane %v814, 2
        %v816 = vadd.f32 %v814, %v815
        %v817 = vrot.slane %v816, 1
        %v818 = vadd.f32 %v816, %v817
        %v819 = vadd.f32 %v791, %v793
        %v820 = vadd.f32 %v819, %v795
        %v821 = vadd.f32 %v820, %v797
        %v822 = vadd.f32 %v821, %v799
        %v823 = vadd.f32 %v822, %v801
        %v824 = vadd.f32 %v823, %v803
        %v825 = vadd.f32 %v824, %v805
        %v826 = vrot.slane %v825, 4
        %v827 = vadd.f32 %v825, %v826
        %v828 = vrot.slane %v827, 2
        %v829 = vadd.f32 %v827, %v828
        %v830 = vrot.slane %v829, 1
        %v831 = vadd.f32 %v829, %v830
        %832 = vset.pattern.permute.xlu0 4
        %833 = vperm.xlu0 %832, %v266
        %v834 = vpop.permute.xlu0 %833
        %v836 = vadd.f32 %v818, %v834
        %v837 = vadd.f32 %v831, %v834
        %v840 = vrot.slane %v837, 7
        %vm841 = vcmask 1040384
        %v842 = vsel %vm841, %v836, %v840
        %v844 = vlaneseq
        %vm845 = vcmp.ge.s32.totalorder %v844, 0
        %vm846 = vcmp.lt.s32.totalorder %v844, 256
        %vm847 = vmand %vm845, %vm846
        %848 = vst.msk [vmem:[%s263] sm:$0x3] %vm847, %v842
        %s849 = smul.u32 2, %s16
        %p850 = scmp.lt.s32.totalorder %s849, 3
        %s851 = scalar_select %p850, %s849, 3
        %s852 = scalar_lea.vmem %s5, %s851
        // Predicated region
        $region79: #{_lambda_.1} parent=73 // pred_check
          %p853 = pneg %p144
        $region80: #{_lambda_.1} parent=73 // pred_check_branch
          %855 = sbr.rel (%p853) target = $region82
        $region81: #{_lambda_.1} parent=73 // pred_region
          %s856 = smul.u32 2, %s16
        $region82: #{_lambda_.1} parent=73 // pred_fallthru
          _
      $region74: #{_lambda_.1} parent=5 // pred_fallthru
        _
      %p857 = scmp.le.s32.totalorder 2, %s11
      // Predicated region
      $region83: #{_lambda_.1} parent=5 // pred_check
        %p858 = pneg %p857
      $region84: #{_lambda_.1} parent=5 // pred_check_branch
        %860 = sbr.rel (%p858) target = $region86
      $region85: #{_lambda_.1} parent=5 // pred_region
        %s861 = ssub.s32 %s11, 2
        // Predicated region
        $region87: #{_lambda_.1} parent=85 // pred_check
          %p862 = pneg %p150
        $region88: #{_lambda_.1} parent=85 // pred_check_branch
          %864 = sbr.rel (%p862) target = $region90
        $region89: #{_lambda_.1} parent=85 // pred_region
          %s865 = smul.u32 2, %s17
          %p866 = scmp.lt.s32.totalorder %s865, 3
          %s867 = scalar_select %p866, %s865, 3
          %s868 = scalar_lea.vmem %s5, %s867
        $region90: #{_lambda_.1} parent=85 // pred_fallthru
          _
      $region86: #{_lambda_.1} parent=5 // pred_fallthru
        _
    $region6: #{_lambda_.1} parent=1 // loop_footer
      %s15 = sadd.s32 1, %s11
    $region7: #{_lambda_.1} parent=1 // loop_footer_branch
      %10 = sbr.rel target = $region3
    $region8: #{_lambda_.1} parent=1 // loop_exit
      _

</llo_original>
